<compile_context>
chip_gen: v5e
topology: v5e:2x2
jax: 0.10.0
libtpu: 0.0.40
codegen_flags: <defaults>
</compile_context>

<pallas_src>
import jax
import jax.numpy as jnp
from jax.experimental import pallas as pl
from jax.experimental.pallas import tpu as pltpu


def _attention_kernel(x_ref, w_ref, b_ref, ctx_ref, attn_ref):
    # x_ref: (TB, S, D) VMEM   w_ref: (1, D) VMEM   b_ref: (1,) SMEM scalar
    x = x_ref[...].astype(jnp.float32)          # (TB, S, D)
    w = w_ref[...].astype(jnp.float32)          # (1, D)
    bias = b_ref[0]                             # scalar (f32, SMEM)

    # scores[b, s] = sum_d x[b, s, d] * w[d] + bias   (VPU mul + lane reduce)
    scores = jnp.sum(x * w[jnp.newaxis, :, :], axis=-1) + bias      # (TB, S)

    # softmax over the sequence axis (dim=1 of the PyTorch (B, S, 1) scores)
    m = jnp.max(scores, axis=-1, keepdims=True)
    e = jnp.exp(scores - m)
    attn = e * pl.reciprocal(jnp.sum(e, axis=-1, keepdims=True), approx=False)

    # lane-dense attention-weight output (trailing 1 added in the wrapper)
    attn_ref[...] = attn.astype(attn_ref.dtype)

    # context[b, d] = sum_s attn[b, s] * x[b, s, d]  (VPU mul + sublane reduce)
    ctx = jnp.sum(attn[:, :, jnp.newaxis] * x, axis=1)              # (TB, D)
    ctx_ref[...] = ctx.astype(ctx_ref.dtype)


def attention_forward(lstm_output, weight, bias, *, block_bytes=4 << 20):
    """
    lstm_output: (B, S, D) with D = 2 * hidden_size
    weight:      (1, D)   (PyTorch nn.Linear(hidden*2, 1) weight, as-is)
    bias:        (1,)     (PyTorch nn.Linear bias)
    Returns (context (B, D), attention_weights (B, S, 1)).
    """
    B, S, D = lstm_output.shape
    dtype = lstm_output.dtype
    itemsize = jnp.dtype(dtype).itemsize

    # --- choose the batch tile: biggest that fits the per-block VMEM budget ---
    row_bytes = max(S * D * itemsize, 1)
    rows_per_block = max(1, block_bytes // row_bytes)
    if rows_per_block >= B:
        tb = B                                   # single step, full extents
    else:
        tb = max(8, (rows_per_block // 8) * 8)   # keep sublane-aligned blocks
    bp = pl.cdiv(B, tb) * tb

    x = lstm_output
    if bp != B:
        # zero-padded batch rows: softmax of zeros is finite; rows are sliced off.
        x = jnp.pad(lstm_output, ((0, bp - B), (0, 0), (0, 0)))

    w_row = jnp.asarray(weight).reshape(1, D).astype(dtype)       # lane-dense (1, D)
    b_smem = jnp.asarray(bias).reshape(1).astype(jnp.float32)     # scalar in SMEM

    grid = (bp // tb,)

    ctx, attn = pl.pallas_call(
        _attention_kernel,
        out_shape=(
            jax.ShapeDtypeStruct((bp, D), dtype),
            jax.ShapeDtypeStruct((bp, S), dtype),
        ),
        grid_spec=pltpu.PrefetchScalarGridSpec(
            num_scalar_prefetch=0,
            grid=grid,
            in_specs=[
                pl.BlockSpec((tb, S, D), lambda b: (b, 0, 0)),
                pl.BlockSpec((1, D), lambda b: (0, 0)),
                pl.BlockSpec(memory_space=pltpu.MemorySpace.SMEM),
            ],
            out_specs=[
                pl.BlockSpec((tb, D), lambda b: (b, 0)),
                pl.BlockSpec((tb, S), lambda b: (b, 0)),
            ],
        ),
        compiler_params=pltpu.CompilerParams(
            dimension_semantics=("parallel",),
        ),
    )(x, w_row, b_smem)

    if bp != B:
        ctx = ctx[:B]
        attn = attn[:B]
    # restore the PyTorch attention-weights shape (B, S, 1) with a free reshape
    return ctx, attn.reshape(B, S, 1)


if __name__ == "__main__":
    key = jax.random.PRNGKey(0)
    k_x, k_w, k_b = jax.random.split(key, 3)

    batch = 2
    seq = 8
    hidden_size = 16
    D = hidden_size * 2  # bi-LSTM output feature size

    lstm_output = jax.random.normal(k_x, (batch, seq, D), dtype=jnp.float32)
    # nn.Linear(hidden_size*2, 1): weight (1, 2H), bias (1,)
    w = jax.random.normal(k_w, (1, D), dtype=jnp.float32) * 0.1
    b = jax.random.normal(k_b, (1,), dtype=jnp.float32) * 0.1

    ctx, attn = attention_forward(lstm_output, w, b)
    ctx = jax.block_until_ready(ctx)
    attn = jax.block_until_ready(attn)

    # Pure-JAX reference (same math as the PyTorch module).
    scores_ref = lstm_output @ w.T + b.reshape(1, 1)       # (B, S, 1)
    attn_ref = jax.nn.softmax(scores_ref, axis=1)          # softmax over seq
    ctx_ref = jnp.sum(lstm_output * attn_ref, axis=1)      # (B, D)

    assert ctx.shape == (batch, D)
    assert attn.shape == (batch, seq, 1)
    assert jnp.allclose(ctx, ctx_ref, atol=1e-5, rtol=1e-5)
    assert jnp.allclose(attn, attn_ref, atol=1e-5, rtol=1e-5)

    print("KERNEL_OK")
</pallas_src>

<mosaic_0001>
module attributes {stable_mosaic.version = 11 : i64} {
  func.func @_attention_kernel(%arg0: i32, %arg1: memref<2x8x32xf32, #tpu.memory_space<vmem>>, %arg2: memref<1x32xf32, #tpu.memory_space<vmem>>, %arg3: memref<1xf32, #tpu.memory_space<smem>>, %arg4: memref<2x32xf32, #tpu.memory_space<vmem>>, %arg5: memref<2x8xf32, #tpu.memory_space<vmem>>) attributes {dimension_semantics = [#tpu.dimension_semantics<parallel>], iteration_bounds = array<i64: 1>, scalar_prefetch = 0 : i64, scratch_operands = 0 : i64, tpu.core_type = #tpu.core_type<tc>, window_params = [{transform_indices = @transform_0, window_bounds = array<i64: 2, 8, 32>}, {pipeline_mode = #tpu.pipeline_mode<synchronous>, transform_indices = @transform_1, window_bounds = array<i64: 1, 32>}, {transform_indices = @transform_2, window_bounds = array<i64: 1>}, {transform_indices = @transform_3, window_bounds = array<i64: 2, 32>}, {transform_indices = @transform_4, window_bounds = array<i64: 2, 8>}]} {
    %c0 = arith.constant 0 : index
    %c0_0 = arith.constant 0 : index
    %c0_1 = arith.constant 0 : index
    %0 = vector.load %arg1[%c0, %c0_0, %c0_1] : memref<2x8x32xf32, #tpu.memory_space<vmem>>, vector<2x8x32xf32>
    %c0_2 = arith.constant 0 : index
    %c0_3 = arith.constant 0 : index
    %1 = vector.load %arg2[%c0_2, %c0_3] : memref<1x32xf32, #tpu.memory_space<vmem>>, vector<1x32xf32>
    %c0_4 = arith.constant 0 : index
    %2 = memref.load %arg3[%c0_4] : memref<1xf32, #tpu.memory_space<smem>>
    %3 = vector.shape_cast %1 : vector<1x32xf32> to vector<1x1x32xf32>
    %4 = vector.broadcast %3 : vector<1x1x32xf32> to vector<2x8x32xf32>
    %5 = arith.mulf %0, %4 : vector<2x8x32xf32>
    %cst = arith.constant dense<0.000000e+00> : vector<2x8xf32>
    %6 = vector.multi_reduction <add>, %5, %cst [2] : vector<2x8x32xf32> to vector<2x8xf32>
    %7 = vector.broadcast %2 : f32 to vector<2x8xf32>
    %8 = arith.addf %6, %7 : vector<2x8xf32>
    %cst_5 = arith.constant dense<0xFF800000> : vector<2xf32>
    %9 = vector.multi_reduction <maximumf>, %8, %cst_5 [1] : vector<2x8xf32> to vector<2xf32>
    %10 = vector.shape_cast %9 : vector<2xf32> to vector<2x1xf32>
    %11 = vector.broadcast %10 : vector<2x1xf32> to vector<2x8xf32>
    %12 = arith.subf %8, %11 : vector<2x8xf32>
    %13 = math.exp %12 : vector<2x8xf32>
    %cst_6 = arith.constant dense<0.000000e+00> : vector<2xf32>
    %14 = vector.multi_reduction <add>, %13, %cst_6 [1] : vector<2x8xf32> to vector<2xf32>
    %15 = vector.shape_cast %14 : vector<2xf32> to vector<2x1xf32>
    %16 = tpu.reciprocal %15 : vector<2x1xf32> -> vector<2x1xf32>
    %17 = vector.broadcast %16 : vector<2x1xf32> to vector<2x8xf32>
    %18 = arith.mulf %13, %17 : vector<2x8xf32>
    %c0_7 = arith.constant 0 : index
    %c0_8 = arith.constant 0 : index
    %19 = vector.load %arg5[%c0_7, %c0_8] : memref<2x8xf32, #tpu.memory_space<vmem>>, vector<2x8xf32>
    tpu.vector_store %arg5[%c0_7, %c0_8], %18 {strides = array<i32>} : memref<2x8xf32, #tpu.memory_space<vmem>>, vector<2x8xf32>,
    %20 = vector.shape_cast %18 : vector<2x8xf32> to vector<2x8x1xf32>
    %21 = vector.broadcast %20 : vector<2x8x1xf32> to vector<2x8x32xf32>
    %22 = arith.mulf %21, %0 : vector<2x8x32xf32>
    %cst_9 = arith.constant dense<0.000000e+00> : vector<2x32xf32>
    %23 = vector.multi_reduction <add>, %22, %cst_9 [1] : vector<2x8x32xf32> to vector<2x32xf32>
    %c0_10 = arith.constant 0 : index
    %c0_11 = arith.constant 0 : index
    %24 = vector.load %arg4[%c0_10, %c0_11] : memref<2x32xf32, #tpu.memory_space<vmem>>, vector<2x32xf32>
    tpu.vector_store %arg4[%c0_10, %c0_11], %23 {strides = array<i32>} : memref<2x32xf32, #tpu.memory_space<vmem>>, vector<2x32xf32>,
    return
  }
  func.func @transform_0(%arg0: i32) -> (i32, i32, i32) {
    %c0_i32 = arith.constant 0 : i32
    %c0_i32_0 = arith.constant 0 : i32
    %c0_i32_1 = arith.constant 0 : i32
    return %arg0, %c0_i32, %c0_i32_0 : i32, i32, i32
  }
  func.func @transform_1(%arg0: i32) -> (i32, i32) {
    %c0_i32 = arith.constant 0 : i32
    %c0_i32_0 = arith.constant 0 : i32
    %c0_i32_1 = arith.constant 0 : i32
    return %c0_i32, %c0_i32_0 : i32, i32
  }
  func.func @transform_2(%arg0: i32) -> i32 {
    %c0_i32 = arith.constant 0 : i32
    %c0_i32_0 = arith.constant 0 : i32
    return %c0_i32 : i32
  }
  func.func @transform_3(%arg0: i32) -> (i32, i32) {
    %c0_i32 = arith.constant 0 : i32
    %c0_i32_0 = arith.constant 0 : i32
    return %arg0, %c0_i32 : i32, i32
  }
  func.func @transform_4(%arg0: i32) -> (i32, i32) {
    %c0_i32 = arith.constant 0 : i32
    %c0_i32_0 = arith.constant 0 : i32
    return %arg0, %c0_i32 : i32, i32
  }
}

</mosaic_0001>

<llo_original>
// kernel: tpu_custom_call.1
$region0: #{tpu_custom_call.1}
  #allocation0 [shape = 'u32[]', space=smem, size = 0x4, offset = 0x4, fixed_abs, tag = 'smem constant byte address 0x4 - core index']
  #allocation1 [shape = 'u32[72,128]{1,0:T(1,128)}', space=vmem, size = 0x9000, scoped, tag = 'internal scratch']
  #allocation2 [shape = 'f32[1]{0:T(128)S(6)}', space=smem, size = 0x200, scoped, tag = 'scoped memory for tpu_custom_call.1']
  %s0 = inlined_call_operand.hbm [shape: f32[2,8,32], index: 0, kind: input, shape index: {}]
  %s1 = inlined_call_operand.vmem [shape: f32[1,32], index: 1, kind: input, shape index: {}]
  %s2 = inlined_call_operand.<no memory space> [shape: f32[1], index: 2, kind: input, shape index: {}]
  %s3 = inlined_call_operand.hbm [shape: f32[2,32], index: 3, kind: output, shape index: {0}]
  %s4 = inlined_call_operand.hbm [shape: f32[2,8], index: 4, kind: output, shape index: {1}]
  %5 = xla_tuple %s3, %s4
  %s6 = sld [smem:[#allocation0]]
  $region34: #{tpu_custom_call.1} parent=0
    _
  %s8 = ssub.s32 1, %s6
  %s9 = scalar_select 0, %s8, %s6
  %10 = sst [smem:[#allocation2]] %s2
  $region1: #{tpu_custom_call.1} parent=0
    #allocation3 [shape = 'u8[8192]{0}', space=vmem, size = 0x2000, scoped, tag = 'input window, operand 0, single buffered']
    #allocation4 [shape = 's32[1]{0}', space=sflag, size = 0x4, scoped, tag = 'scoped memory for tpu_custom_call.1']
    #allocation5 [shape = 's32[1]{0}', space=sflag, size = 0x4, scoped, tag = 'scoped memory for tpu_custom_call.1']
    #allocation6 [shape = 'u8[1024]{0}', space=vmem, size = 0x400, scoped, tag = 'output window, operand 0, single buffered']
    #allocation7 [shape = 'u8[1024]{0}', space=vmem, size = 0x400, scoped, tag = 'output window, operand 1, single buffered']
    #allocation8 [shape = 's32[1]{0}', space=sflag, size = 0x4, scoped, tag = 'scoped memory for tpu_custom_call.1']
    %11 = vsyncpa [#allocation4], 0
    %12 = vsyncpa [#allocation5], 0
    %13 = vsyncpa [#allocation8], 0
    // Predicated region
    $region2: #{tpu_custom_call.1} parent=1 // pred_check
      _
    $region3: #{tpu_custom_call.1} parent=1 // pred_check_branch
      %15 = sbr.rel (0) target = $region5
    $region4: #{tpu_custom_call.1} parent=1 // pred_region
      %17 = vsyncadd [#allocation4], 0
      %s18 = sshll.u32 %s0, 4
      %s19 = int_to_ptr.hbm [resolvable:$true] %s18
      %s20 = sshll.u32 [#allocation3], 4
      %s21 = int_to_ptr.vmem [resolvable:$true] %s20
      %26 = dma.hbm_to_vmem [thread:$0]  %s19, 256, %s21, [#allocation4], 128, 128, 8
    $region5: #{tpu_custom_call.1} parent=1 // pred_fallthru
      _
    // Predicated region
    $region6: #{tpu_custom_call.1} parent=1 // pred_check
      _
    $region7: #{tpu_custom_call.1} parent=1 // pred_check_branch
      %28 = sbr.rel (0) target = $region9
    $region8: #{tpu_custom_call.1} parent=1 // pred_region
      _
    $region9: #{tpu_custom_call.1} parent=1 // pred_fallthru
      _
    // Predicated region
    $region10: #{tpu_custom_call.1} parent=1 // pred_check
      _
    $region11: #{tpu_custom_call.1} parent=1 // pred_check_branch
      %30 = sbr.rel (0) target = $region13
    $region12: #{tpu_custom_call.1} parent=1 // pred_region
      _
    $region13: #{tpu_custom_call.1} parent=1 // pred_fallthru
      _
    // Predicated region
    $region14: #{tpu_custom_call.1} parent=1 // pred_check
      _
    $region15: #{tpu_custom_call.1} parent=1 // pred_check_branch
      %32 = sbr.rel (0) target = $region17
    $region16: #{tpu_custom_call.1} parent=1 // pred_region
      %34 = dma.done [#allocation4], 256
    $region17: #{tpu_custom_call.1} parent=1 // pred_fallthru
      _
    %v35 = vld [vmem:[#allocation3] sm:$0xff]
    %v36 = vld [vmem:[#allocation3 + $0x8] sm:$0xff]
    %v37 = vld [vmem:[%s1] sm:$0x1]
    %s38 = sld [smem:[#allocation2]]
    %v40 = vperm.slane %v37, 0
    %v42 = vmul.f32 %v35, %v40
    %v43 = vmul.f32 %v36, %v40
    %vm44 = vcmask 261120
    %v45 = vsel %vm44, %v42, 0.0
    %46 = vadd.xlane.f32.xlu0 %v45
    %v47 = vpop.xlane.xlu0 %46
    %v48 = vsel %vm44, %v43, 0.0
    %49 = vadd.xlane.f32.xlu0 %v48
    %v50 = vpop.xlane.xlu0 %49
    %v51 = vstv %s38
    %v52 = vadd.f32 %v47, %v51
    %v53 = vadd.f32 %v50, %v51
    %v56 = vlaneseq
    %v57 = vand.u32 %v56, 127
    %v58 = vperm.slane %v52, %v57
    %v59 = vperm.slane %v53, %v57
    %vm60 = vcmask 1041409
    %v61 = vsel %vm60, %v59, %v58
    %vm63 = vcmask 58368
    %v64 = vsel %vm63, %v61, -inf
    %65 = vmax.xlane.f32.xlu0 %v64
    %v66 = vpop.xlane.xlu0 %65
    %v68 = vperm.slane %v66, 0
    %v69 = vperm.slane %v66, 1
    %v72 = vsub.f32 %v52, %v68
    %v73 = vsub.f32 %v53, %v69
    %v74 = vmul.f32 %v72, 1.442695
    %v75 = vpow.pop %v74
    %v76 = vmul.f32 %v73, 1.442695
    %v77 = vpow.pop %v76
    %80 = vset.pattern.permute.xlu0 0
    %81 = vperm.xlu0 %80, %v75
    %v82 = vpop.permute.xlu0 %81
    %83 = vset.pattern.permute.xlu0 0
    %84 = vperm.xlu0 %83, %v77
    %v85 = vpop.permute.xlu0 %84
    %v86 = vperm.slane %v82, %v57
    %v87 = vperm.slane %v85, %v57
    %v88 = vsel %vm60, %v87, %v86
    %v90 = vsel %vm63, %v88, 0.0
    %91 = vadd.xlane.f32.xlu0 %v90
    %v92 = vpop.xlane.xlu0 %91
    %v93 = vrcp.pop %v92
    %v94 = vmul.f32 %v92, %v93
    %v95 = vsub.f32 1.0, %v94
    %v96 = vmul.f32 %v93, %v95
    %v97 = vadd.f32 %v93, %v96
    %vm98 = vweird.f32 %v92
    %vm99 = vweird.f32 %v93
    %vm100 = vmor %vm98, %vm99
    %v101 = vsel %vm100, %v93, %v97
    %v102 = vand.u32 2147483647, %v92
    %vm103 = vcmp.eq.f32.partialorder %v102, 8.507059e+37
    %v104 = vand.u32 %v92, 2147483648
    %v105 = vor.u32 1.1754944e-38, %v104
    %v106 = vsel %vm103, %v105, %v101
    %v108 = vperm.slane %v106, 0
    %v109 = vperm.slane %v106, 1
    %v112 = vmul.f32 %v75, %v108
    %v113 = vmul.f32 %v77, %v109
    %116 = vset.pattern.permute.xlu0 0
    %117 = vperm.xlu0 %116, %v112
    %v118 = vpop.permute.xlu0 %117
    %119 = vset.pattern.permute.xlu0 0
    %120 = vperm.xlu0 %119, %v113
    %v121 = vpop.permute.xlu0 %120
    %v122 = vperm.slane %v118, %v57
    %v123 = vperm.slane %v121, %v57
    %v124 = vsel %vm60, %v123, %v122
    %126 = vst.msk [vmem:[#allocation7] sm:$0x3] %vm63, %v124
    %v129 = vmul.f32 %v118, %v35
    %v130 = vmul.f32 %v121, %v36
    %v131 = vsel %vm44, %v129, 0.0
    %v132 = vrot.slane %v131, 4
    %v133 = vadd.f32 %v131, %v132
    %v134 = vrot.slane %v133, 2
    %v135 = vadd.f32 %v133, %v134
    %v136 = vrot.slane %v135, 1
    %v137 = vadd.f32 %v135, %v136
    %v138 = vsel %vm44, %v130, 0.0
    %v139 = vrot.slane %v138, 4
    %v140 = vadd.f32 %v138, %v139
    %v141 = vrot.slane %v140, 2
    %v142 = vadd.f32 %v140, %v141
    %v143 = vrot.slane %v142, 1
    %v144 = vadd.f32 %v142, %v143
    %v147 = vsel %vm60, %v144, %v137
    %vm149 = vcmask 254976
    %150 = vst.msk [vmem:[#allocation6] sm:$0x3] %vm149, %v147
    // Predicated region
    $region18: #{tpu_custom_call.1} parent=1 // pred_check
      _
    $region19: #{tpu_custom_call.1} parent=1 // pred_check_branch
      %152 = sbr.rel (0) target = $region21
    $region20: #{tpu_custom_call.1} parent=1 // pred_region
      %154 = vsyncadd [#allocation5], 0
      %s156 = sshll.u32 [#allocation6], 4
      %s157 = int_to_ptr.vmem [resolvable:$true] %s156
      %s158 = sshll.u32 %s3, 4
      %s159 = int_to_ptr.hbm [resolvable:$true] %s158
      %161 = dma.vmem_to_hbm [thread:$0]  %s157, 32, %s159, [#allocation5]
    $region21: #{tpu_custom_call.1} parent=1 // pred_fallthru
      _
    // Predicated region
    $region22: #{tpu_custom_call.1} parent=1 // pred_check
      _
    $region23: #{tpu_custom_call.1} parent=1 // pred_check_branch
      %163 = sbr.rel (0) target = $region25
    $region24: #{tpu_custom_call.1} parent=1 // pred_region
      %165 = vsyncadd [#allocation8], 0
      %s167 = sshll.u32 [#allocation7], 4
      %s168 = int_to_ptr.vmem [resolvable:$true] %s167
      %s169 = sshll.u32 %s4, 4
      %s170 = int_to_ptr.hbm [resolvable:$true] %s169
      %172 = dma.vmem_to_hbm [thread:$0]  %s168, 32, %s170, [#allocation8]
    $region25: #{tpu_custom_call.1} parent=1 // pred_fallthru
      _
    // Predicated region
    $region26: #{tpu_custom_call.1} parent=1 // pred_check
      _
    $region27: #{tpu_custom_call.1} parent=1 // pred_check_branch
      %174 = sbr.rel (0) target = $region29
    $region28: #{tpu_custom_call.1} parent=1 // pred_region
      %176 = dma.done [#allocation5], 32
    $region29: #{tpu_custom_call.1} parent=1 // pred_fallthru
      _
    // Predicated region
    $region30: #{tpu_custom_call.1} parent=1 // pred_check
      _
    $region31: #{tpu_custom_call.1} parent=1 // pred_check_branch
      %178 = sbr.rel (0) target = $region33
    $region32: #{tpu_custom_call.1} parent=1 // pred_region
      %180 = dma.done [#allocation8], 32
    $region33: #{tpu_custom_call.1} parent=1 // pred_fallthru
      _
    %181 = vsyncpa [#allocation4], 1
    %182 = vsyncpa [#allocation5], 1
    %183 = vsyncpa [#allocation8], 1

</llo_original>
